<compile_context>
chip_gen: v6e
topology: v6e:2x2x1
jax: 0.10.0
libtpu: 0.0.40
codegen_flags: <defaults>
</compile_context>

<pallas_src>
import jax
import jax.numpy as jnp
from jax import lax
from jax.experimental import pallas as pl
from jax.experimental.pallas import tpu as pltpu


def _conv_bn_prelu_kernel(xa_ref, m_ref, shift_ref, alpha_ref, o_ref):
    # xa_ref:    (NB*H, K*W*Cin)  H-shift-augmented input rows (padding baked in)
    # m_ref:     (K*W*Cin, W*Cout) stacked banded conv weights (BN scale folded)
    # shift_ref: (1, W*Cout)       lane-tiled conv-bias + BN shift
    # alpha_ref: (1,) in SMEM      PReLU shared slope
    # o_ref:     (NB*H, W*Cout)    lane-dense output slab
    acc = jnp.dot(xa_ref[...], m_ref[...], preferred_element_type=jnp.float32)
    acc = acc + shift_ref[...]                      # broadcast add of the shift row
    a = alpha_ref[0]
    o_ref[...] = jnp.where(acc >= 0.0, acc, a * acc).astype(o_ref.dtype)


def _pick_images_per_step(N, H, KWCi, WCo, vmem_budget_bytes=8 << 20):
    """Images per grid step: collapse the batch unless per-step VMEM gets large."""
    bytes_per_image = H * (KWCi + WCo) * 4
    cap = max(1, vmem_budget_bytes // max(bytes_per_image, 1))
    nb = min(N, cap)
    while N % nb:           # keep the grid exact (N divisible by nb)
        nb -= 1
    return nb


def conv_block_forward(x_nhwc, w_hwio, conv_bias, gamma, beta,
                       running_mean, running_var, prelu_alpha, eps=1e-5):
    """Conv2d(stride=1, padding=K//2) + eval-mode BatchNorm + PReLU. NHWC in/out."""
    N, H, W, Cin = x_nhwc.shape
    K = w_hwio.shape[0]
    Cout = w_hwio.shape[3]
    # TODO(synk): only stride=1 / odd kernel_size (padding=K//2) is implemented.
    assert K % 2 == 1, "odd kernel_size required (padding = kernel_size // 2)"
    p = K // 2
    WCi, WCo = W * Cin, W * Cout
    KWCi = K * WCi

    # ---- parameter preprocessing (weights only, wrapper-side) --------------
    scale = (gamma / jnp.sqrt(running_var + eps)).astype(jnp.float32)       # (Cout,)
    shift = (beta + (conv_bias - running_mean) * scale).astype(jnp.float32)  # (Cout,)
    w_scaled = w_hwio.astype(jnp.float32) * scale[None, None, None, :]      # (K,K,Cin,Cout)

    # Banded matrices: M[kh, w'*Cin+ci, w*Cout+co] = w_scaled[kh, w'-w+p, ci, co]
    # (zero where w'-w+p is outside [0,K) -> encodes the W-direction padding),
    # stacked along kh into one (K*W*Cin, W*Cout) contraction.
    w_idx = jnp.arange(W)
    kw = w_idx[:, None] - w_idx[None, :] + p                   # (W, W)
    valid = (kw >= 0) & (kw < K)
    kw_c = jnp.clip(kw, 0, K - 1)
    band = w_scaled[:, kw_c]                                   # (K, W, W, Cin, Cout)
    band = jnp.where(valid[None, :, :, None, None], band, 0.0)
    m_stacked = band.transpose(0, 1, 3, 2, 4).reshape(KWCi, WCo)

    shift_row = jnp.tile(shift, W).reshape(1, WCo)             # shift[co] at lane w*Cout+co
    alpha = prelu_alpha.reshape(1).astype(jnp.float32)

    # ---- input plumbing: bake H-padding + batch boundaries into the rows ----
    xf = x_nhwc.astype(jnp.float32).reshape(N, H, WCi)
    xf_pad = jnp.pad(xf, ((0, 0), (p, p), (0, 0)))             # zero H-halo per image
    xa = jnp.concatenate([xf_pad[:, kh:kh + H, :] for kh in range(K)], axis=-1)
    xa = xa.reshape(N * H, KWCi)                               # (N*H, K*W*Cin)

    # ---- single collapsed-batch grid step (grid=(1,) at N=2) ---------------
    NB = _pick_images_per_step(N, H, KWCi, WCo)
    steps = N // NB
    rows = NB * H

    out_flat = pl.pallas_call(
        _conv_bn_prelu_kernel,
        out_shape=jax.ShapeDtypeStruct((N * H, WCo), x_nhwc.dtype),
        grid_spec=pltpu.PrefetchScalarGridSpec(
            num_scalar_prefetch=0,
            grid=(steps,),
            in_specs=[
                pl.BlockSpec((rows, KWCi), lambda i: (i, 0)),
                pl.BlockSpec((KWCi, WCo), lambda i: (0, 0)),
                pl.BlockSpec((1, WCo), lambda i: (0, 0)),
                pl.BlockSpec(memory_space=pltpu.MemorySpace.SMEM),
            ],
            out_specs=pl.BlockSpec((rows, WCo), lambda i: (i, 0)),
        ),
        # Sub-microsecond per-step work: don't ask for a megacore split.
        compiler_params=pltpu.CompilerParams(
            dimension_semantics=("arbitrary",)),
    )(xa, m_stacked, shift_row, alpha)

    return out_flat.reshape(N, H, W, Cout)


def reference_forward(x_nhwc, w_hwio, conv_bias, gamma, beta,
                      running_mean, running_var, prelu_alpha, eps=1e-5):
    y = lax.conv_general_dilated(
        x_nhwc, w_hwio, window_strides=(1, 1), padding="SAME",
        dimension_numbers=("NHWC", "HWIO", "NHWC"))
    y = y + conv_bias
    y = (y - running_mean) / jnp.sqrt(running_var + eps) * gamma + beta
    return jnp.where(y >= 0.0, y, prelu_alpha * y)


if __name__ == "__main__":
    # Module config: in_channels=4, out_channels=8, kernel_size=3, stride=1,
    #                batch_norm=False (BN still added), activation='prelu'
    N, Cin, Cout, H, W, K = 2, 4, 8, 16, 16, 3

    key = jax.random.PRNGKey(0)
    k1, k2, k3, k4, k5, k6, k7 = jax.random.split(key, 7)

    # Deterministic synthetic parameters (not a checkpoint load).
    x_nchw = jax.random.normal(k1, (N, Cin, H, W), jnp.float32)
    w_oihw = jax.random.normal(k2, (Cout, Cin, K, K), jnp.float32) * 0.1
    conv_bias = jax.random.normal(k3, (Cout,), jnp.float32) * 0.1
    gamma = 0.5 + jax.random.uniform(k4, (Cout,), jnp.float32)
    beta = jax.random.normal(k5, (Cout,), jnp.float32) * 0.1
    running_mean = jax.random.normal(k6, (Cout,), jnp.float32) * 0.1
    running_var = 0.5 + jax.random.uniform(k7, (Cout,), jnp.float32)
    prelu_alpha = jnp.array(0.25, jnp.float32)   # nn.PReLU() default shared slope

    # PyTorch NCHW -> kernel NHWC; OIHW -> HWIO (layout plumbing).
    x_nhwc = jnp.transpose(x_nchw, (0, 2, 3, 1))
    w_hwio = jnp.transpose(w_oihw, (2, 3, 1, 0))

    out = conv_block_forward(x_nhwc, w_hwio, conv_bias, gamma, beta,
                             running_mean, running_var, prelu_alpha)
    out = jax.block_until_ready(out)

    ref = reference_forward(x_nhwc, w_hwio, conv_bias, gamma, beta,
                            running_mean, running_var, prelu_alpha)
    assert out.shape == (N, H, W, Cout)
    assert jnp.allclose(out, ref, atol=1e-4, rtol=1e-4), "mismatch vs reference"

    # Result in PyTorch NCHW convention for downstream use.
    out_nchw = jnp.transpose(out, (0, 3, 1, 2))
    assert out_nchw.shape == (N, Cout, H, W)

    print("KERNEL_OK")
</pallas_src>

<mosaic_0001>
module attributes {stable_mosaic.version = 11 : i64} {
  func.func @_conv_bn_prelu_kernel(%arg0: i32, %arg1: memref<32x192xf32, #tpu.memory_space<vmem>>, %arg2: memref<192x128xf32, #tpu.memory_space<vmem>>, %arg3: memref<1x128xf32, #tpu.memory_space<vmem>>, %arg4: memref<1xf32, #tpu.memory_space<smem>>, %arg5: memref<32x128xf32, #tpu.memory_space<vmem>>) attributes {dimension_semantics = [#tpu.dimension_semantics<arbitrary>], iteration_bounds = array<i64: 1>, scalar_prefetch = 0 : i64, scratch_operands = 0 : i64, tpu.core_type = #tpu.core_type<tc>, window_params = [{transform_indices = @transform_0, window_bounds = array<i64: 32, 192>}, {pipeline_mode = #tpu.pipeline_mode<synchronous>, transform_indices = @transform_1, window_bounds = array<i64: 192, 128>}, {pipeline_mode = #tpu.pipeline_mode<synchronous>, transform_indices = @transform_2, window_bounds = array<i64: 1, 128>}, {transform_indices = @transform_3, window_bounds = array<i64: 1>}, {transform_indices = @transform_4, window_bounds = array<i64: 32, 128>}]} {
    %c0 = arith.constant 0 : index
    %c0_0 = arith.constant 0 : index
    %0 = vector.load %arg1[%c0, %c0_0] : memref<32x192xf32, #tpu.memory_space<vmem>>, vector<32x192xf32>
    %c0_1 = arith.constant 0 : index
    %c0_2 = arith.constant 0 : index
    %1 = vector.load %arg2[%c0_1, %c0_2] : memref<192x128xf32, #tpu.memory_space<vmem>>, vector<192x128xf32>
    %cst = arith.constant dense<0.000000e+00> : vector<32x128xf32>
    %2 = tpu.matmul %0, %1, %cst {dimension_numbers = #tpu.dot_dimension_numbers<[1], [0], [0], [1], [0, 0, 1, 1], [], []>} : vector<32x192xf32>, vector<192x128xf32>, vector<32x128xf32> -> vector<32x128xf32>
    %c0_3 = arith.constant 0 : index
    %c0_4 = arith.constant 0 : index
    %3 = vector.load %arg3[%c0_3, %c0_4] : memref<1x128xf32, #tpu.memory_space<vmem>>, vector<1x128xf32>
    %4 = vector.broadcast %3 : vector<1x128xf32> to vector<32x128xf32>
    %5 = arith.addf %2, %4 : vector<32x128xf32>
    %c0_5 = arith.constant 0 : index
    %6 = memref.load %arg4[%c0_5] : memref<1xf32, #tpu.memory_space<smem>>
    %cst_6 = arith.constant 0.000000e+00 : f32
    %7 = vector.broadcast %cst_6 : f32 to vector<32x128xf32>
    %8 = arith.cmpf oge, %5, %7 : vector<32x128xf32>
    %9 = vector.broadcast %6 : f32 to vector<32x128xf32>
    %10 = arith.mulf %9, %5 : vector<32x128xf32>
    %11 = arith.select %8, %5, %10 : vector<32x128xi1>, vector<32x128xf32>
    %c0_7 = arith.constant 0 : index
    %c0_8 = arith.constant 0 : index
    %12 = vector.load %arg5[%c0_7, %c0_8] : memref<32x128xf32, #tpu.memory_space<vmem>>, vector<32x128xf32>
    tpu.vector_store %arg5[%c0_7, %c0_8], %11 {strides = array<i32>} : memref<32x128xf32, #tpu.memory_space<vmem>>, vector<32x128xf32>,
    return
  }
  func.func @transform_0(%arg0: i32) -> (i32, i32) {
    %c0_i32 = arith.constant 0 : i32
    %c0_i32_0 = arith.constant 0 : i32
    return %arg0, %c0_i32 : i32, i32
  }
  func.func @transform_1(%arg0: i32) -> (i32, i32) {
    %c0_i32 = arith.constant 0 : i32
    %c0_i32_0 = arith.constant 0 : i32
    %c0_i32_1 = arith.constant 0 : i32
    return %c0_i32, %c0_i32_0 : i32, i32
  }
  func.func @transform_2(%arg0: i32) -> (i32, i32) {
    %c0_i32 = arith.constant 0 : i32
    %c0_i32_0 = arith.constant 0 : i32
    %c0_i32_1 = arith.constant 0 : i32
    return %c0_i32, %c0_i32_0 : i32, i32
  }
  func.func @transform_3(%arg0: i32) -> i32 {
    %c0_i32 = arith.constant 0 : i32
    %c0_i32_0 = arith.constant 0 : i32
    return %c0_i32 : i32
  }
  func.func @transform_4(%arg0: i32) -> (i32, i32) {
    %c0_i32 = arith.constant 0 : i32
    %c0_i32_0 = arith.constant 0 : i32
    return %arg0, %c0_i32 : i32, i32
  }
}

</mosaic_0001>

<llo_original>
// kernel: tpu_custom_call.1
$region0: #{tpu_custom_call.1}
  #allocation0 [shape = 'u32[]', space=smem, size = 0x4, offset = 0x4, fixed_abs, tag = 'smem constant byte address 0x4 - core index']
  #allocation1 [shape = 'u32[144,128]{1,0:T(1,128)}', space=vmem, size = 0x12000, scoped, tag = 'internal scratch']
  #allocation2 [shape = 'f32[1]{0:T(128)S(6)}', space=smem, size = 0x200, scoped, tag = 'scoped memory for tpu_custom_call.1']
  %s0 = inlined_call_operand.hbm [shape: f32[32,192], index: 0, kind: input, shape index: {}]
  %s1 = inlined_call_operand.hbm [shape: f32[192,128], index: 1, kind: input, shape index: {}]
  %s2 = inlined_call_operand.vmem [shape: f32[1,128], index: 2, kind: input, shape index: {}]
  %s3 = inlined_call_operand.<no memory space> [shape: f32[1], index: 3, kind: input, shape index: {}]
  %s4 = inlined_call_operand.hbm [shape: f32[32,128], index: 4, kind: output, shape index: {}]
  %s5 = sld [smem:[#allocation0]]
  $region34: #{tpu_custom_call.1} parent=0
    _
  %s7 = ssub.s32 1, %s5
  %s8 = scalar_select 0, %s7, %s5
  %9 = sst [smem:[#allocation2]] %s3
  $region1: #{tpu_custom_call.1} parent=0
    #allocation3 [shape = 'u8[32768]{0}', space=vmem, size = 0x8000, scoped, tag = 'input window, operand 0, single buffered']
    #allocation4 [shape = 's32[1]{0}', space=sflag, size = 0x4, scoped, tag = 'scoped memory for tpu_custom_call.1']
    #allocation5 [shape = 's32[1]{0}', space=sflag, size = 0x4, scoped, tag = 'scoped memory for tpu_custom_call.1']
    #allocation6 [shape = 'u8[98304]{0}', space=vmem, size = 0x18000, scoped, tag = 'input window, operand 1, single buffered']
    #allocation7 [shape = 's32[1]{0}', space=sflag, size = 0x4, scoped, tag = 'scoped memory for tpu_custom_call.1']
    #allocation8 [shape = 'u8[16384]{0}', space=vmem, size = 0x4000, scoped, tag = 'output window, operand 0, single buffered']
    %10 = vsyncpa [#allocation4], 0
    %11 = vsyncpa [#allocation7], 0
    %12 = vsyncpa [#allocation5], 0
    // Predicated region
    $region2: #{tpu_custom_call.1} parent=1 // pred_check
      _
    $region3: #{tpu_custom_call.1} parent=1 // pred_check_branch
      %14 = sbr.rel (0) target = $region5
    $region4: #{tpu_custom_call.1} parent=1 // pred_region
      %s16 = ssub.s32 1024, 1024
      %17 = vsyncadd [#allocation4], %s16
      %s18 = sshll.u32 [#allocation3], 4
      %s19 = int_to_ptr.vmem [resolvable:$true] %s18
      %24 = dma.hbm_to_vmem [thread:$0]  %s0, 1024, %s19, [#allocation4], 256, 256, 16
    $region5: #{tpu_custom_call.1} parent=1 // pred_fallthru
      _
    // Predicated region
    $region6: #{tpu_custom_call.1} parent=1 // pred_check
      _
    $region7: #{tpu_custom_call.1} parent=1 // pred_check_branch
      %26 = sbr.rel (0) target = $region9
    $region8: #{tpu_custom_call.1} parent=1 // pred_region
      %s28 = ssub.s32 3072, 3072
      %29 = vsyncadd [#allocation7], %s28
      %s30 = sshll.u32 [#allocation6], 4
      %s31 = int_to_ptr.vmem [resolvable:$true] %s30
      %36 = dma.hbm_to_vmem [thread:$0]  %s1, 3072, %s31, [#allocation7], 128, 128, 8
    $region9: #{tpu_custom_call.1} parent=1 // pred_fallthru
      _
    // Predicated region
    $region10: #{tpu_custom_call.1} parent=1 // pred_check
      _
    $region11: #{tpu_custom_call.1} parent=1 // pred_check_branch
      %38 = sbr.rel (0) target = $region13
    $region12: #{tpu_custom_call.1} parent=1 // pred_region
      _
    $region13: #{tpu_custom_call.1} parent=1 // pred_fallthru
      _
    // Predicated region
    $region14: #{tpu_custom_call.1} parent=1 // pred_check
      _
    $region15: #{tpu_custom_call.1} parent=1 // pred_check_branch
      %40 = sbr.rel (0) target = $region17
    $region16: #{tpu_custom_call.1} parent=1 // pred_region
      _
    $region17: #{tpu_custom_call.1} parent=1 // pred_fallthru
      _
    // Predicated region
    $region18: #{tpu_custom_call.1} parent=1 // pred_check
      _
    $region19: #{tpu_custom_call.1} parent=1 // pred_check_branch
      %42 = sbr.rel (0) target = $region21
    $region20: #{tpu_custom_call.1} parent=1 // pred_region
      %43 = dma.done [#allocation4], 1024
    $region21: #{tpu_custom_call.1} parent=1 // pred_fallthru
      _
    // Predicated region
    $region22: #{tpu_custom_call.1} parent=1 // pred_check
      _
    $region23: #{tpu_custom_call.1} parent=1 // pred_check_branch
      %45 = sbr.rel (0) target = $region25
    $region24: #{tpu_custom_call.1} parent=1 // pred_region
      %46 = dma.done [#allocation7], 3072
    $region25: #{tpu_custom_call.1} parent=1 // pred_fallthru
      _
    %v47 = vld [vmem:[#allocation3] sm:$0xff]
    %v48 = vld [vmem:[#allocation3 + $0x8] sm:$0xff]
    %v49 = vld [vmem:[#allocation3 + $0x10] sm:$0xff]
    %v50 = vld [vmem:[#allocation3 + $0x18] sm:$0xff]
    %v51 = vld [vmem:[#allocation3 + $0x20] sm:$0xff]
    %v52 = vld [vmem:[#allocation3 + $0x28] sm:$0xff]
    %v53 = vld [vmem:[#allocation3 + $0x30] sm:$0xff]
    %v54 = vld [vmem:[#allocation3 + $0x38] sm:$0xff]
    %v55 = vld [vmem:[#allocation6] sm:$0xff]
    %v56 = vld [vmem:[#allocation6 + $0x8] sm:$0xff]
    %v57 = vld [vmem:[#allocation6 + $0x10] sm:$0xff]
    %v58 = vld [vmem:[#allocation6 + $0x18] sm:$0xff]
    %v59 = vld [vmem:[#allocation6 + $0x20] sm:$0xff]
    %v60 = vld [vmem:[#allocation6 + $0x28] sm:$0xff]
    %v61 = vld [vmem:[#allocation6 + $0x30] sm:$0xff]
    %v62 = vld [vmem:[#allocation6 + $0x38] sm:$0xff]
    %v63 = vld [vmem:[#allocation6 + $0x40] sm:$0xff]
    %v64 = vld [vmem:[#allocation6 + $0x48] sm:$0xff]
    %v65 = vld [vmem:[#allocation6 + $0x50] sm:$0xff]
    %v66 = vld [vmem:[#allocation6 + $0x58] sm:$0xff]
    %v67 = vld [vmem:[#allocation6 + $0x60] sm:$0xff]
    %v68 = vld [vmem:[#allocation6 + $0x68] sm:$0xff]
    %v69 = vld [vmem:[#allocation6 + $0x70] sm:$0xff]
    %v70 = vld [vmem:[#allocation6 + $0x78] sm:$0xff]
    %v71 = vld [vmem:[#allocation6 + $0x80] sm:$0xff]
    %v72 = vld [vmem:[#allocation6 + $0x88] sm:$0xff]
    %v73 = vld [vmem:[#allocation6 + $0x90] sm:$0xff]
    %v74 = vld [vmem:[#allocation6 + $0x98] sm:$0xff]
    %v75 = vld [vmem:[#allocation6 + $0xa0] sm:$0xff]
    %v76 = vld [vmem:[#allocation6 + $0xa8] sm:$0xff]
    %v77 = vld [vmem:[#allocation6 + $0xb0] sm:$0xff]
    %v78 = vld [vmem:[#allocation6 + $0xb8] sm:$0xff]
    %v79 = vld [vmem:[%s2] sm:$0x1]
    %v81 = vlaneseq
    %v82 = vshrl.u32 %v81, 7
    %v83 = vsub.s32 0, %v82
    %v84 = vrot.slane %v79, %v83
    %vm86 = vcmask 523264
    %v88 = vsel %vm86, %v48, 0
    %v91 = vsel %vm86, %v50, 0
    %v94 = vsel %vm86, %v52, 0
    %v97 = vsel %vm86, %v54, 0
    %99 = vmatprep.subr.mxu0 0.0
    %100 = vmatpush1.msra.mxu0 %v70
    %101 = vmatprep.subr.mxu0 0.0
    %102 = vmatpush1.msra.mxu0 %v69
    %103 = vmatprep.subr.mxu0 0.0
    %104 = vmatpush1.msra.mxu0 %v68
    %105 = vmatprep.subr.mxu0 0.0
    %106 = vmatpush1.msra.mxu0 %v67
    %107 = vmatprep.subr.mxu0 0.0
    %108 = vmatpush1.msra.mxu0 %v66
    %109 = vmatprep.subr.mxu0 0.0
    %110 = vmatpush1.msra.mxu0 %v65
    %111 = vmatprep.subr.mxu0 0.0
    %112 = vmatpush1.msra.mxu0 %v64
    %113 = vmatprep.subr.mxu0 0.0
    %114 = vmatpush1.msra.mxu0 %v63
    %115 = vmatprep.subr.mxu0 0.0
    %116 = vmatpush1.msra.mxu0 %v62
    %117 = vmatprep.subr.mxu0 0.0
    %118 = vmatpush1.msra.mxu0 %v61
    %119 = vmatprep.subr.mxu0 0.0
    %120 = vmatpush1.msra.mxu0 %v60
    %121 = vmatprep.subr.mxu0 0.0
    %122 = vmatpush1.msra.mxu0 %v59
    %123 = vmatprep.subr.mxu0 0.0
    %124 = vmatpush1.msra.mxu0 %v58
    %125 = vmatprep.subr.mxu0 0.0
    %126 = vmatpush1.msra.mxu0 %v57
    %127 = vmatprep.subr.mxu0 0.0
    %128 = vmatpush1.msra.mxu0 %v56
    %129 = vmatprep.subr.mxu0 0.0
    %130 = vmatpush1.msra.mxu0 %v55
    %131 = vmatprep.subr.mxu0 0.0
    %132 = vmatpush2.msra.mxu0 0.0
    %133 = vmatprep.subr.mxu0 0.0
    %134 = vmatpush2.msra.mxu0 0.0
    %135 = vmatprep.subr.mxu0 0.0
    %136 = vmatpush2.msra.mxu0 0.0
    %137 = vmatprep.subr.mxu0 0.0
    %138 = vmatpush2.msra.mxu0 0.0
    %139 = vmatprep.subr.mxu0 0.0
    %140 = vmatpush2.msra.mxu0 0.0
    %141 = vmatprep.subr.mxu0 0.0
    %142 = vmatpush2.msra.mxu0 0.0
    %143 = vmatprep.subr.mxu0 0.0
    %144 = vmatpush2.msra.mxu0 0.0
    %145 = vmatprep.subr.mxu0 0.0
    %146 = vmatpush2.msra.mxu0 0.0
    %147 = vmatprep.subr.mxu0 0.0
    %148 = vmatpush2.msra.mxu0 %v78
    %149 = vmatprep.subr.mxu0 0.0
    %150 = vmatpush2.msra.mxu0 %v77
    %151 = vmatprep.subr.mxu0 0.0
    %152 = vmatpush2.msra.mxu0 %v76
    %153 = vmatprep.subr.mxu0 0.0
    %154 = vmatpush2.msra.mxu0 %v75
    %155 = vmatprep.subr.mxu0 0.0
    %156 = vmatpush2.msra.mxu0 %v74
    %157 = vmatprep.subr.mxu0 0.0
    %158 = vmatpush2.msra.mxu0 %v73
    %159 = vmatprep.subr.mxu0 0.0
    %160 = vmatpush2.msra.mxu0 %v72
    %161 = vmatprep.subr.mxu0 0.0
    %162 = vmatpush2.msra.mxu0 %v71
    %163 = vmatprep.mubr.f32.mxu0 %v88
    %164 = vmatmul.mubr.f32.gmra.mxu0 %v47
    %v165 = vpop.f32.mrf.mxu0
    %v166 = vadd.f32 %v84, %v165
    %v167 = vpop.f32.mrf.mxu0
    %168 = vmatprep.mubr.f32.mxu0 %v91
    %169 = vmatmul.mubr.f32.gmra.mxu0 %v49
    %v170 = vpop.f32.mrf.mxu0
    %v171 = vadd.f32 %v84, %v170
    %v172 = vpop.f32.mrf.mxu0
    %173 = vmatprep.mubr.f32.mxu0 %v94
    %174 = vmatmul.mubr.f32.gmra.mxu0 %v51
    %v175 = vpop.f32.mrf.mxu0
    %v176 = vadd.f32 %v84, %v175
    %v177 = vpop.f32.mrf.mxu0
    %178 = vmatprep.mubr.f32.mxu0 %v97
    %179 = vmatmul.mubr.f32.gmra.mxu0 %v53
    %v180 = vpop.f32.mrf.mxu0
    %v181 = vadd.f32 %v84, %v180
    %v182 = vpop.f32.mrf.mxu0
    %183 = vdwg.mxu0
    %s184 = sld [smem:[#allocation2]]
    %vm185 = vcmp.ge.f32.partialorder %v166, 0.0
    %vm186 = vcmp.ge.f32.partialorder %v171, 0.0
    %vm187 = vcmp.ge.f32.partialorder %v176, 0.0
    %vm188 = vcmp.ge.f32.partialorder %v181, 0.0
    %v189 = vstv %s184
    %v190 = vmul.f32 %v189, %v166
    %v191 = vmul.f32 %v189, %v171
    %v192 = vmul.f32 %v189, %v176
    %v193 = vmul.f32 %v189, %v181
    %v194 = vsel %vm185, %v166, %v190
    %v195 = vsel %vm186, %v171, %v191
    %v196 = vsel %vm187, %v176, %v192
    %v197 = vsel %vm188, %v181, %v193
    %198 = vst [vmem:[#allocation8] sm:$0xff] %v194
    %199 = vst [vmem:[#allocation8 + $0x8] sm:$0xff] %v195
    %200 = vst [vmem:[#allocation8 + $0x10] sm:$0xff] %v196
    %201 = vst [vmem:[#allocation8 + $0x18] sm:$0xff] %v197
    // Predicated region
    $region26: #{tpu_custom_call.1} parent=1 // pred_check
      _
    $region27: #{tpu_custom_call.1} parent=1 // pred_check_branch
      %203 = sbr.rel (0) target = $region29
    $region28: #{tpu_custom_call.1} parent=1 // pred_region
      %s205 = ssub.s32 512, 512
      %206 = vsyncadd [#allocation5], %s205
      %s207 = sshll.u32 [#allocation8], 4
      %s208 = int_to_ptr.vmem [resolvable:$true] %s207
      %213 = dma.vmem_to_hbm [thread:$0]  %s208, 512, %s4, [#allocation5], 128, 128, 8
    $region29: #{tpu_custom_call.1} parent=1 // pred_fallthru
      _
    // Predicated region
    $region30: #{tpu_custom_call.1} parent=1 // pred_check
      _
    $region31: #{tpu_custom_call.1} parent=1 // pred_check_branch
      %215 = sbr.rel (0) target = $region33
    $region32: #{tpu_custom_call.1} parent=1 // pred_region
      %216 = dma.done [#allocation5], 512
    $region33: #{tpu_custom_call.1} parent=1 // pred_fallthru
      _
    %217 = vsyncpa [#allocation4], 1
    %218 = vsyncpa [#allocation7], 1
    %219 = vsyncpa [#allocation5], 1

</llo_original>
